<compile_context>
chip_gen: v7x
topology: tpu7x:2x2x1
jax: 0.10.0
libtpu: 0.0.40
codegen_flags: <defaults>
</compile_context>

<pallas_src>
import functools

import jax
import jax.numpy as jnp
from jax import lax
from jax.experimental import pallas as pl
from jax.experimental.pallas import tpu as pltpu


# Explicit scoped-VMEM budget.  Blocks below are sized to stay well under this;
# on v7x (64 MiB total VMEM) halve block_q/block_k if you raise the defaults.
_VMEM_LIMIT_BYTES = 64 * 1024 * 1024


def _choose_block(dim, preferred):
    """Largest block <= preferred that evenly divides dim (falls back to dim)."""
    if dim <= preferred:
        return dim
    for b in (preferred, 512, 256, 128, 64, 32, 16, 8):
        if b <= preferred and dim % b == 0:
            return b
    return dim


def _refined_reciprocal(denom):
    """EUP approximate reciprocal + two Newton steps (operates on a (rows, 1)
    column -> negligible VPU cost, ~f32-exact result)."""
    inv = pl.reciprocal(denom, approx=True)
    inv = inv * (2.0 - denom * inv)
    inv = inv * (2.0 - denom * inv)
    return inv


def _sdpa_attn_kernel(q_ref, k_ref, v_ref, out_ref, attn_ref, *, scale):
    # q_ref: (1, bq, D), k_ref: (1, Lk, D), v_ref: (1, Lk, Dv)
    q = q_ref[0]
    k = k_ref[0]
    v = v_ref[0]

    # Fold 1/temperature into Q; keep the operand dtype so bf16 inputs feed the
    # MXU's fast path.
    qs = q * jnp.asarray(scale, q.dtype)

    # scores = (q/T) @ k^T, contracting over D without materializing k.T.
    scores = lax.dot_general(
        qs, k, (((1,), (1,)), ((), ())), preferred_element_type=jnp.float32)

    # Row softmax in f32 (PyTorch Softmax(dim=2)).
    m = jnp.max(scores, axis=-1, keepdims=True)
    p = jnp.exp(scores - m)
    denom = jnp.sum(p, axis=-1, keepdims=True)
    attn = p * _refined_reciprocal(denom)

    # dropout (eval mode) == identity
    # TODO(synk): training-mode dropout via pltpu.prng_seed + stateful_bernoulli.

    out = jnp.dot(attn.astype(v.dtype), v, preferred_element_type=jnp.float32)

    attn_ref[0] = attn.astype(attn_ref.dtype)
    out_ref[0] = out.astype(out_ref.dtype)


def _sdpa_flash_kernel(q_ref, k_ref, v_ref, out_ref, m_sc, l_sc, acc_sc, *,
                       scale):
    # Flash-style online softmax over the Lk reduction axis (innermost grid axis).
    kv = pl.program_id(2)

    @pl.when(kv == 0)
    def _():
        m_sc[...] = jnp.full_like(m_sc, -jnp.inf)
        l_sc[...] = jnp.zeros_like(l_sc)
        acc_sc[...] = jnp.zeros_like(acc_sc)

    q = q_ref[0]
    k = k_ref[0]
    v = v_ref[0]

    qs = q * jnp.asarray(scale, q.dtype)
    s = lax.dot_general(
        qs, k, (((1,), (1,)), ((), ())), preferred_element_type=jnp.float32)

    m_prev = m_sc[...]
    m_new = jnp.maximum(m_prev, jnp.max(s, axis=-1, keepdims=True))
    alpha = jnp.exp(m_prev - m_new)
    p = jnp.exp(s - m_new)

    l_sc[...] = alpha * l_sc[...] + jnp.sum(p, axis=-1, keepdims=True)
    acc_sc[...] = alpha * acc_sc[...] + jnp.dot(
        p.astype(v.dtype), v, preferred_element_type=jnp.float32)
    m_sc[...] = m_new

    @pl.when(kv == pl.num_programs(2) - 1)
    def _():
        out_ref[0] = (acc_sc[...] * _refined_reciprocal(l_sc[...])).astype(
            out_ref.dtype)


def scaled_dot_product_attention(q, k, v, temperature, *, return_attn=True,
                                 block_q=512, block_k=512):
    """q: (B, Lq, D), k: (B, Lk, D), v: (B, Lk, Dv).

    return_attn=True  -> (output, attn), matching the PyTorch module.
    return_attn=False -> (output, None), flash-style path that never
                         materializes the (Lq, Lk) probability matrix in HBM.
    Halve block_q/block_k on v7x (64 MiB VMEM) for very long sequences.
    """
    B, Lq, D = q.shape
    Bk, Lk, Dk = k.shape
    Bv, Lkv, Dv = v.shape
    assert D == Dk and Bk == B and Bv == B and Lkv == Lk

    scale = 1.0 / float(temperature)
    bq = _choose_block(Lq, block_q)
    nq = Lq // bq

    if return_attn:
        kernel = functools.partial(_sdpa_attn_kernel, scale=scale)
        grid_spec = pltpu.PrefetchScalarGridSpec(
            num_scalar_prefetch=0,
            grid=(B, nq),
            in_specs=[
                pl.BlockSpec((1, bq, D), lambda b, i: (b, i, 0)),
                # K/V ignore the q-block axis -> stay resident in VMEM across
                # all q blocks of a batch element (no redundant HBM traffic).
                pl.BlockSpec((1, Lk, D), lambda b, i: (b, 0, 0)),
                pl.BlockSpec((1, Lk, Dv), lambda b, i: (b, 0, 0)),
            ],
            out_specs=[
                pl.BlockSpec((1, bq, Dv), lambda b, i: (b, i, 0)),
                pl.BlockSpec((1, bq, Lk), lambda b, i: (b, i, 0)),
            ],
        )
        out_shapes = (
            jax.ShapeDtypeStruct((B, Lq, Dv), q.dtype),   # output
            jax.ShapeDtypeStruct((B, Lq, Lk), q.dtype),   # attn probabilities
        )
        return pl.pallas_call(
            kernel,
            out_shape=out_shapes,
            grid_spec=grid_spec,
            compiler_params=pltpu.CompilerParams(
                dimension_semantics=("parallel", "parallel"),
                vmem_limit_bytes=_VMEM_LIMIT_BYTES),
        )(q, k, v)

    # Flash-style path: tile Lk, online softmax, output only.
    bk = _choose_block(Lk, block_k)
    nk = Lk // bk
    kernel = functools.partial(_sdpa_flash_kernel, scale=scale)
    grid_spec = pltpu.PrefetchScalarGridSpec(
        num_scalar_prefetch=0,
        grid=(B, nq, nk),
        in_specs=[
            pl.BlockSpec((1, bq, D), lambda b, i, j: (b, i, 0)),
            pl.BlockSpec((1, bk, D), lambda b, i, j: (b, j, 0)),
            pl.BlockSpec((1, bk, Dv), lambda b, i, j: (b, j, 0)),
        ],
        out_specs=pl.BlockSpec((1, bq, Dv), lambda b, i, j: (b, i, 0)),
        scratch_shapes=[
            pltpu.VMEM((bq, 1), jnp.float32),   # running max
            pltpu.VMEM((bq, 1), jnp.float32),   # running denominator
            pltpu.VMEM((bq, Dv), jnp.float32),  # running PV accumulator
        ],
    )
    out = pl.pallas_call(
        kernel,
        out_shape=jax.ShapeDtypeStruct((B, Lq, Dv), q.dtype),
        grid_spec=grid_spec,
        compiler_params=pltpu.CompilerParams(
            dimension_semantics=("parallel", "parallel", "arbitrary"),
            vmem_limit_bytes=_VMEM_LIMIT_BYTES),
    )(q, k, v)
    return out, None


if __name__ == "__main__":
    key = jax.random.PRNGKey(0)
    kq, kk, kv_ = jax.random.split(key, 3)

    # Small shapes consistent with the module's bmm convention.
    B, Lq, Lk, D, Dv = 2, 8, 8, 32, 32
    temperature = float(jnp.sqrt(jnp.float32(D)))  # usual sqrt(d_k) temperature

    q = jax.random.normal(kq, (B, Lq, D), dtype=jnp.float32)
    k = jax.random.normal(kk, (B, Lk, D), dtype=jnp.float32)
    v = jax.random.normal(kv_, (B, Lk, Dv), dtype=jnp.float32)

    output, attn = scaled_dot_product_attention(q, k, v, temperature)
    jax.block_until_ready((output, attn))

    scores_ref = jnp.einsum("bqd,bkd->bqk", q, k) / temperature
    attn_ref = jax.nn.softmax(scores_ref, axis=2)
    out_ref = jnp.einsum("bqk,bkd->bqd", attn_ref, v)
    assert jnp.allclose(attn, attn_ref, atol=1e-4, rtol=1e-4)
    assert jnp.allclose(output, out_ref, atol=1e-4, rtol=1e-4)

    # Exercise the tiled paths (q-block tiling + flash-style Lk reduction) at a
    # slightly larger, still-small shape.
    B2, L2, D2 = 2, 256, 64
    t2 = float(jnp.sqrt(jnp.float32(D2)))
    q2 = jax.random.normal(kq, (B2, L2, D2), dtype=jnp.float32)
    k2 = jax.random.normal(kk, (B2, L2, D2), dtype=jnp.float32)
    v2 = jax.random.normal(kv_, (B2, L2, D2), dtype=jnp.float32)

    out_a, attn_a = scaled_dot_product_attention(q2, k2, v2, t2, block_q=128)
    out_f, _ = scaled_dot_product_attention(q2, k2, v2, t2, return_attn=False,
                                            block_q=128, block_k=128)
    jax.block_until_ready((out_a, attn_a, out_f))

    s2 = jnp.einsum("bqd,bkd->bqk", q2, k2) / t2
    a2 = jax.nn.softmax(s2, axis=2)
    o2 = jnp.einsum("bqk,bkd->bqd", a2, v2)
    assert jnp.allclose(attn_a, a2, atol=1e-4, rtol=1e-4)
    assert jnp.allclose(out_a, o2, atol=1e-4, rtol=1e-4)
    assert jnp.allclose(out_f, o2, atol=1e-4, rtol=1e-4)

    print("KERNEL_OK")
</pallas_src>

<mosaic_0001>
module attributes {stable_mosaic.version = 11 : i64} {
  func.func @_sdpa_attn_kernel(%arg0: i32, %arg1: i32, %arg2: memref<1x8x32xf32, #tpu.memory_space<vmem>>, %arg3: memref<1x8x32xf32, #tpu.memory_space<vmem>>, %arg4: memref<1x8x32xf32, #tpu.memory_space<vmem>>, %arg5: memref<1x8x32xf32, #tpu.memory_space<vmem>>, %arg6: memref<1x8x8xf32, #tpu.memory_space<vmem>>) attributes {dimension_semantics = [#tpu.dimension_semantics<parallel>, #tpu.dimension_semantics<parallel>], iteration_bounds = array<i64: 2, 1>, scalar_prefetch = 0 : i64, scratch_operands = 0 : i64, tpu.core_type = #tpu.core_type<tc>, window_params = [{transform_indices = @transform_0, window_bounds = array<i64: 1, 8, 32>}, {transform_indices = @transform_1, window_bounds = array<i64: 1, 8, 32>}, {transform_indices = @transform_2, window_bounds = array<i64: 1, 8, 32>}, {transform_indices = @transform_3, window_bounds = array<i64: 1, 8, 32>}, {transform_indices = @transform_4, window_bounds = array<i64: 1, 8, 8>}]} {
    %c0 = arith.constant 0 : index
    %c0_0 = arith.constant 0 : index
    %c0_1 = arith.constant 0 : index
    %0 = vector.load %arg2[%c0, %c0_0, %c0_1] : memref<1x8x32xf32, #tpu.memory_space<vmem>>, vector<1x8x32xf32>
    %1 = vector.shape_cast %0 : vector<1x8x32xf32> to vector<8x32xf32>
    %c0_2 = arith.constant 0 : index
    %c0_3 = arith.constant 0 : index
    %c0_4 = arith.constant 0 : index
    %2 = vector.load %arg3[%c0_2, %c0_3, %c0_4] : memref<1x8x32xf32, #tpu.memory_space<vmem>>, vector<1x8x32xf32>
    %3 = vector.shape_cast %2 : vector<1x8x32xf32> to vector<8x32xf32>
    %c0_5 = arith.constant 0 : index
    %c0_6 = arith.constant 0 : index
    %c0_7 = arith.constant 0 : index
    %4 = vector.load %arg4[%c0_5, %c0_6, %c0_7] : memref<1x8x32xf32, #tpu.memory_space<vmem>>, vector<1x8x32xf32>
    %5 = vector.shape_cast %4 : vector<1x8x32xf32> to vector<8x32xf32>
    %cst = arith.constant 0.176776692 : f32
    %6 = vector.broadcast %cst : f32 to vector<8x32xf32>
    %7 = arith.mulf %1, %6 : vector<8x32xf32>
    %cst_8 = arith.constant dense<0.000000e+00> : vector<8x8xf32>
    %8 = tpu.matmul %7, %3, %cst_8 {dimension_numbers = #tpu.dot_dimension_numbers<[1], [1], [0], [0], [0, 0, 1, 0], [], []>} : vector<8x32xf32>, vector<8x32xf32>, vector<8x8xf32> -> vector<8x8xf32>
    %cst_9 = arith.constant dense<0xFF800000> : vector<8xf32>
    %9 = vector.multi_reduction <maximumf>, %8, %cst_9 [1] : vector<8x8xf32> to vector<8xf32>
    %10 = vector.shape_cast %9 : vector<8xf32> to vector<8x1xf32>
    %11 = vector.broadcast %10 : vector<8x1xf32> to vector<8x8xf32>
    %12 = arith.subf %8, %11 : vector<8x8xf32>
    %13 = math.exp %12 : vector<8x8xf32>
    %cst_10 = arith.constant dense<0.000000e+00> : vector<8xf32>
    %14 = vector.multi_reduction <add>, %13, %cst_10 [1] : vector<8x8xf32> to vector<8xf32>
    %15 = vector.shape_cast %14 : vector<8xf32> to vector<8x1xf32>
    %16 = tpu.reciprocal %15 {approx = true} : vector<8x1xf32> -> vector<8x1xf32>
    %17 = arith.mulf %15, %16 : vector<8x1xf32>
    %cst_11 = arith.constant 2.000000e+00 : f32
    %18 = vector.broadcast %cst_11 : f32 to vector<8x1xf32>
    %19 = arith.subf %18, %17 : vector<8x1xf32>
    %20 = arith.mulf %16, %19 : vector<8x1xf32>
    %21 = arith.mulf %15, %20 : vector<8x1xf32>
    %cst_12 = arith.constant 2.000000e+00 : f32
    %22 = vector.broadcast %cst_12 : f32 to vector<8x1xf32>
    %23 = arith.subf %22, %21 : vector<8x1xf32>
    %24 = arith.mulf %20, %23 : vector<8x1xf32>
    %25 = vector.broadcast %24 : vector<8x1xf32> to vector<8x8xf32>
    %26 = arith.mulf %13, %25 : vector<8x8xf32>
    %cst_13 = arith.constant dense<0.000000e+00> : vector<8x32xf32>
    %27 = tpu.matmul %26, %5, %cst_13 {dimension_numbers = #tpu.dot_dimension_numbers<[1], [0], [0], [1], [0, 0, 1, 1], [], []>} : vector<8x8xf32>, vector<8x32xf32>, vector<8x32xf32> -> vector<8x32xf32>
    %c0_14 = arith.constant 0 : index
    %c0_15 = arith.constant 0 : index
    %c0_16 = arith.constant 0 : index
    %28 = vector.load %arg6[%c0_14, %c0_15, %c0_16] : memref<1x8x8xf32, #tpu.memory_space<vmem>>, vector<1x8x8xf32>
    %29 = vector.shape_cast %28 : vector<1x8x8xf32> to vector<8x8xf32>
    %30 = vector.shape_cast %26 : vector<8x8xf32> to vector<1x8x8xf32>
    tpu.vector_store %arg6[%c0_14, %c0_15, %c0_16], %30 {strides = array<i32>} : memref<1x8x8xf32, #tpu.memory_space<vmem>>, vector<1x8x8xf32>,
    %c0_17 = arith.constant 0 : index
    %c0_18 = arith.constant 0 : index
    %c0_19 = arith.constant 0 : index
    %31 = vector.load %arg5[%c0_17, %c0_18, %c0_19] : memref<1x8x32xf32, #tpu.memory_space<vmem>>, vector<1x8x32xf32>
    %32 = vector.shape_cast %31 : vector<1x8x32xf32> to vector<8x32xf32>
    %33 = vector.shape_cast %27 : vector<8x32xf32> to vector<1x8x32xf32>
    tpu.vector_store %arg5[%c0_17, %c0_18, %c0_19], %33 {strides = array<i32>} : memref<1x8x32xf32, #tpu.memory_space<vmem>>, vector<1x8x32xf32>,
    return
  }
  func.func @transform_0(%arg0: i32, %arg1: i32) -> (i32, i32, i32) {
    %c0_i32 = arith.constant 0 : i32
    %c0_i32_0 = arith.constant 0 : i32
    return %arg0, %arg1, %c0_i32 : i32, i32, i32
  }
  func.func @transform_1(%arg0: i32, %arg1: i32) -> (i32, i32, i32) {
    %c0_i32 = arith.constant 0 : i32
    %c0_i32_0 = arith.constant 0 : i32
    %c0_i32_1 = arith.constant 0 : i32
    return %arg0, %c0_i32, %c0_i32_0 : i32, i32, i32
  }
  func.func @transform_2(%arg0: i32, %arg1: i32) -> (i32, i32, i32) {
    %c0_i32 = arith.constant 0 : i32
    %c0_i32_0 = arith.constant 0 : i32
    %c0_i32_1 = arith.constant 0 : i32
    return %arg0, %c0_i32, %c0_i32_0 : i32, i32, i32
  }
  func.func @transform_3(%arg0: i32, %arg1: i32) -> (i32, i32, i32) {
    %c0_i32 = arith.constant 0 : i32
    %c0_i32_0 = arith.constant 0 : i32
    return %arg0, %arg1, %c0_i32 : i32, i32, i32
  }
  func.func @transform_4(%arg0: i32, %arg1: i32) -> (i32, i32, i32) {
    %c0_i32 = arith.constant 0 : i32
    %c0_i32_0 = arith.constant 0 : i32
    return %arg0, %arg1, %c0_i32 : i32, i32, i32
  }
}

</mosaic_0001>

<llo_original>
// kernel: tpu_custom_call.1
$region0: #{tpu_custom_call.1}
  #allocation0 [shape = 'u32[]', space=smem, size = 0x4, offset = 0x4, fixed_abs, tag = 'smem constant byte address 0x4 - core index']
  #allocation1 [shape = 'u32[144,128]{1,0:T(1,128)}', space=vmem, size = 0x12000, scoped, tag = 'internal scratch']
  %s0 = inlined_call_operand.hbm [shape: f32[2,8,32], index: 0, kind: input, shape index: {}]
  %s1 = inlined_call_operand.hbm [shape: f32[2,8,32], index: 1, kind: input, shape index: {}]
  %s2 = inlined_call_operand.hbm [shape: f32[2,8,32], index: 2, kind: input, shape index: {}]
  %s3 = inlined_call_operand.hbm [shape: f32[2,8,32], index: 3, kind: output, shape index: {0}]
  %s4 = inlined_call_operand.hbm [shape: f32[2,8,8], index: 4, kind: output, shape index: {1}]
  %5 = xla_tuple %s3, %s4
  %s6 = sld [smem:[#allocation0]]
  $region65: #{tpu_custom_call.1} parent=0
    _
  %s8 = ssub.s32 1, %s6
  %s9 = scalar_select 0, %s8, %s6
  $region1: #{tpu_custom_call.1} parent=0
    #allocation2 [shape = 'u8[8192]{0}', space=vmem, size = 0x2000, scoped, tag = 'input window, operand 0']
    #allocation3 [shape = 's32[2]{0}', space=sflag, size = 0x8, scoped, tag = 'scoped memory for tpu_custom_call.1']
    #allocation4 [shape = 's32[2]{0}', space=sflag, size = 0x8, scoped, tag = 'scoped memory for tpu_custom_call.1']
    #allocation5 [shape = 'u8[8192]{0}', space=vmem, size = 0x2000, scoped, tag = 'input window, operand 1']
    #allocation6 [shape = 's32[2]{0}', space=sflag, size = 0x8, scoped, tag = 'scoped memory for tpu_custom_call.1']
    #allocation7 [shape = 'u8[8192]{0}', space=vmem, size = 0x2000, scoped, tag = 'input window, operand 2']
    #allocation8 [shape = 'u8[8192]{0}', space=vmem, size = 0x2000, scoped, tag = 'output window, operand 0']
    #allocation9 [shape = 'u8[8192]{0}', space=vmem, size = 0x2000, scoped, tag = 'output window, operand 1']
    #allocation10 [shape = 's32[2]{0}', space=sflag, size = 0x8, scoped, tag = 'scoped memory for tpu_custom_call.1']
    %10 = vsyncpa [#allocation3], 0
    %s11 = scalar_lea.sflag [#allocation3], 1
    %12 = vsyncpa %s11, 0
    %13 = vsyncpa [#allocation6], 0
    %s14 = scalar_lea.sflag [#allocation6], 1
    %15 = vsyncpa %s14, 0
    %16 = vsyncpa [#allocation4], 0
    %s17 = scalar_lea.sflag [#allocation4], 1
    %18 = vsyncpa %s17, 0
    %19 = vsyncpa [#allocation10], 0
    %s20 = scalar_lea.sflag [#allocation10], 1
    %21 = vsyncpa %s20, 0
    loop: start=0, step=1, limit=4
    $region2: #{tpu_custom_call.1} parent=1 // loop_pre_header
      _
    $region3: #{tpu_custom_call.1} parent=1 // loop_header
      %s23 = sphi 0, %s27
      %p24 = scmp.ge.s32.totalorder %s23, 4
      %s30 = sphi 0, %s42
      %s31 = sphi 0, %s38
      %s32 = sphi 0, %s30
      %s33 = sphi 0, %s31
      %s34 = sphi 0, %s32
      %s35 = sphi 0, %s33
      %s47 = sphi 0, %s49
      %s50 = sphi 0, %s47
      %s51 = sphi 0, %s50
      %s67 = sphi 0, %s51
      %s73 = sphi 0, %s75
      %s76 = sphi 0, %s73
      %s77 = sphi 0, %s76
      %s93 = sphi 0, %s77
      %s99 = sphi 0, %s101
      %s102 = sphi 0, %s99
      %s103 = sphi 0, %s102
      %s119 = sphi 0, %s103
      %s127 = sphi 0, %s129
      %s130 = sphi 0, %s127
      %s131 = sphi 0, %s130
      %s147 = sphi 0, %s131
      %s155 = sphi 0, %s157
      %s158 = sphi 0, %s155
      %s159 = sphi 0, %s158
      %s175 = sphi 0, %s159
    $region4: #{tpu_custom_call.1} parent=1 // loop_header_branch
      %26 = sbr.rel (%p24) target = $region8
    $region5: #{tpu_custom_call.1} parent=1 // loop_body
      %s28 = ssub.s32 %s23, 1
      %s29 = ssub.s32 %s23, 2
      %s36 = sadd.s32 1, %s31
      %p37 = scmp.ge.s32.totalorder %s36, 1
      %s38 = scalar_select %p37, 0, %s36
      %s39 = sadd.s32 1, %s30
      %s40 = scalar_select %p37, %s39, %s30
      %p41 = scmp.ge.s32.totalorder %s40, 2
      %s42 = scalar_select %p41, 0, %s40
      %s43 = ssub.s32 %s30, %s42
      %s44 = ssub.s32 %s31, %s38
      %s45 = sor.u32 %s43, %s44
      %p46 = scmp.eq.s32.totalorder %s45, 0
      %s48 = sadd.s32 %s47, 1
      %s49 = scalar_select %p46, %s47, %s48
      %p52 = pneg %p46
      %p53 = scmp.eq.s32.totalorder %s23, 1
      %p54 = por %p52, %p53
      %p55 = scmp.ne.s32.totalorder %s47, %s50
      %p56 = scmp.eq.s32.totalorder %s23, 0
      %p57 = por %p55, %p56
      %p58 = scmp.ne.s32.totalorder %s47, %s50
      %p59 = scmp.eq.s32.totalorder %s28, 1
      %p60 = por %p58, %p59
      %p61 = scmp.ne.s32.totalorder %s50, %s51
      %p62 = scmp.eq.s32.totalorder %s28, 0
      %p63 = por %p61, %p62
      %p64 = scmp.ne.s32.totalorder %s50, %s51
      %p65 = scmp.eq.s32.totalorder %s29, 1
      %p66 = por %p64, %p65
      %p68 = scmp.ne.s32.totalorder %s51, %s67
      %p69 = scmp.eq.s32.totalorder %s29, 0
      %p70 = por %p68, %p69
      %s71 = ssub.s32 %s30, %s42
      %p72 = scmp.eq.s32.totalorder %s71, 0
      %s74 = sadd.s32 %s73, 1
      %s75 = scalar_select %p72, %s73, %s74
      %p78 = pneg %p72
      %p79 = scmp.eq.s32.totalorder %s23, 1
      %p80 = por %p78, %p79
      %p81 = scmp.ne.s32.totalorder %s73, %s76
      %p82 = scmp.eq.s32.totalorder %s23, 0
      %p83 = por %p81, %p82
      %p84 = scmp.ne.s32.totalorder %s73, %s76
      %p85 = scmp.eq.s32.totalorder %s28, 1
      %p86 = por %p84, %p85
      %p87 = scmp.ne.s32.totalorder %s76, %s77
      %p88 = scmp.eq.s32.totalorder %s28, 0
      %p89 = por %p87, %p88
      %p90 = scmp.ne.s32.totalorder %s76, %s77
      %p91 = scmp.eq.s32.totalorder %s29, 1
      %p92 = por %p90, %p91
      %p94 = scmp.ne.s32.totalorder %s77, %s93
      %p95 = scmp.eq.s32.totalorder %s29, 0
      %p96 = por %p94, %p95
      %s97 = ssub.s32 %s30, %s42
      %p98 = scmp.eq.s32.totalorder %s97, 0
      %s100 = sadd.s32 %s99, 1
      %s101 = scalar_select %p98, %s99, %s100
      %p104 = pneg %p98
      %p105 = scmp.eq.s32.totalorder %s23, 1
      %p106 = por %p104, %p105
      %p107 = scmp.ne.s32.totalorder %s99, %s102
      %p108 = scmp.eq.s32.totalorder %s23, 0
      %p109 = por %p107, %p108
      %p110 = scmp.ne.s32.totalorder %s99, %s102
      %p111 = scmp.eq.s32.totalorder %s28, 1
      %p112 = por %p110, %p111
      %p113 = scmp.ne.s32.totalorder %s102, %s103
      %p114 = scmp.eq.s32.totalorder %s28, 0
      %p115 = por %p113, %p114
      %p116 = scmp.ne.s32.totalorder %s102, %s103
      %p117 = scmp.eq.s32.totalorder %s29, 1
      %p118 = por %p116, %p117
      %p120 = scmp.ne.s32.totalorder %s103, %s119
      %p121 = scmp.eq.s32.totalorder %s29, 0
      %p122 = por %p120, %p121
      %s123 = ssub.s32 %s30, %s42
      %s124 = ssub.s32 %s31, %s38
      %s125 = sor.u32 %s123, %s124
      %p126 = scmp.eq.s32.totalorder %s125, 0
      %s128 = sadd.s32 %s127, 1
      %s129 = scalar_select %p126, %s127, %s128
      %p132 = pneg %p126
      %p133 = scmp.eq.s32.totalorder %s23, 1
      %p134 = por %p132, %p133
      %p135 = scmp.ne.s32.totalorder %s127, %s130
      %p136 = scmp.eq.s32.totalorder %s23, 0
      %p137 = por %p135, %p136
      %p138 = scmp.ne.s32.totalorder %s127, %s130
      %p139 = scmp.eq.s32.totalorder %s28, 1
      %p140 = por %p138, %p139
      %p141 = scmp.ne.s32.totalorder %s130, %s131
      %p142 = scmp.eq.s32.totalorder %s28, 0
      %p143 = por %p141, %p142
      %p144 = scmp.ne.s32.totalorder %s130, %s131
      %p145 = scmp.eq.s32.totalorder %s29, 1
      %p146 = por %p144, %p145
      %p148 = scmp.ne.s32.totalorder %s131, %s147
      %p149 = scmp.eq.s32.totalorder %s29, 0
      %p150 = por %p148, %p149
      %s151 = ssub.s32 %s30, %s42
      %s152 = ssub.s32 %s31, %s38
      %s153 = sor.u32 %s151, %s152
      %p154 = scmp.eq.s32.totalorder %s153, 0
      %s156 = sadd.s32 %s155, 1
      %s157 = scalar_select %p154, %s155, %s156
      %p160 = pneg %p154
      %p161 = scmp.eq.s32.totalorder %s23, 1
      %p162 = por %p160, %p161
      %p163 = scmp.ne.s32.totalorder %s155, %s158
      %p164 = scmp.eq.s32.totalorder %s23, 0
      %p165 = por %p163, %p164
      %p166 = scmp.ne.s32.totalorder %s155, %s158
      %p167 = scmp.eq.s32.totalorder %s28, 1
      %p168 = por %p166, %p167
      %p169 = scmp.ne.s32.totalorder %s158, %s159
      %p170 = scmp.eq.s32.totalorder %s28, 0
      %p171 = por %p169, %p170
      %p172 = scmp.ne.s32.totalorder %s158, %s159
      %p173 = scmp.eq.s32.totalorder %s29, 1
      %p174 = por %p172, %p173
      %p176 = scmp.ne.s32.totalorder %s159, %s175
      %p177 = scmp.eq.s32.totalorder %s29, 0
      %p178 = por %p176, %p177
      %p179 = scmp.le.s32.totalorder 1, %s23
      %p180 = scmp.lt.s32.totalorder %s23, 3
      %p181 = pnand %p179, %p180
      %p182 = pneg %p181
      // Predicated region
      $region9: #{tpu_custom_call.1} parent=5 // pred_check
        _
      $region10: #{tpu_custom_call.1} parent=5 // pred_check_branch
        %184 = sbr.rel (%p181) target = $region12
      $region11: #{tpu_custom_call.1} parent=5 // pred_region
        %s185 = ssub.s32 %s23, 1
      $region12: #{tpu_custom_call.1} parent=5 // pred_fallthru
        _
      %p186 = scmp.lt.s32.totalorder %s23, 2
      // Predicated region
      $region13: #{tpu_custom_call.1} parent=5 // pred_check
        %p187 = pneg %p186
      $region14: #{tpu_custom_call.1} parent=5 // pred_check_branch
        %189 = sbr.rel (%p187) target = $region16
      $region15: #{tpu_custom_call.1} parent=5 // pred_region
        // Predicated region
        $region17: #{tpu_custom_call.1} parent=15 // pred_check
          %p190 = pneg %p57
        $region18: #{tpu_custom_call.1} parent=15 // pred_check_branch
          %192 = sbr.rel (%p190) target = $region20
        $region19: #{tpu_custom_call.1} parent=15 // pred_region
          %s193 = sand.u32 %s47, 1
          %s194 = scalar_lea.sflag [#allocation3], %s193
          %s195 = sand.u32 %s47, 1
          %s196 = smul.addr %s195, 8
          %s197 = scalar_lea.vmem [#allocation2], %s196
          %s199 = ssub.s32 128, 128
          %200 = vsyncadd %s194, %s199
          %s201 = sadd.s32 %s31, %s30
          %s202 = smul.addr %s201, 128
          %s203 = scalar_lea.hbm %s0, %s202
          %s205 = sshll.u32 %s197, 4
          %s206 = int_to_ptr.vmem [resolvable:$true] %s205
          %208 = dma.hbm_to_vmem [thread:$0]  %s203, 128, %s206, %s194
        $region20: #{tpu_custom_call.1} parent=15 // pred_fallthru
          _
        // Predicated region
        $region21: #{tpu_custom_call.1} parent=15 // pred_check
          %p209 = pneg %p83
        $region22: #{tpu_custom_call.1} parent=15 // pred_check_branch
          %211 = sbr.rel (%p209) target = $region24
        $region23: #{tpu_custom_call.1} parent=15 // pred_region
          %s212 = sand.u32 %s23, 1
          %s213 = scalar_lea.sflag [#allocation6], %s212
          %s214 = sand.u32 %s73, 1
          %s215 = smul.addr %s214, 8
          %s216 = scalar_lea.vmem [#allocation5], %s215
          %s218 = ssub.s32 128, 128
          %219 = vsyncadd %s213, %s218
          %s220 = smul.addr %s30, 128
          %s221 = scalar_lea.hbm %s1, %s220
          %s223 = sshll.u32 %s216, 4
          %s224 = int_to_ptr.vmem [resolvable:$true] %s223
          %226 = dma.hbm_to_vmem [thread:$0]  %s221, 128, %s224, %s213
        $region24: #{tpu_custom_call.1} parent=15 // pred_fallthru
          _
        // Predicated region
        $region25: #{tpu_custom_call.1} parent=15 // pred_check
          %p227 = pneg %p109
        $region26: #{tpu_custom_call.1} parent=15 // pred_check_branch
          %229 = sbr.rel (%p227) target = $region28
        $region27: #{tpu_custom_call.1} parent=15 // pred_region
          %s230 = sand.u32 %s23, 1
          %s231 = scalar_lea.sflag [#allocation6], %s230
          %s232 = sand.u32 %s99, 1
          %s233 = smul.addr %s232, 8
          %s234 = scalar_lea.vmem [#allocation7], %s233
          %s236 = ssub.s32 128, 128
          %237 = vsyncadd %s231, %s236
          %s238 = smul.addr %s30, 128
          %s239 = scalar_lea.hbm %s2, %s238
          %s241 = sshll.u32 %s234, 4
          %s242 = int_to_ptr.vmem [resolvable:$true] %s241
          %244 = dma.hbm_to_vmem [thread:$0]  %s239, 128, %s242, %s231
        $region28: #{tpu_custom_call.1} parent=15 // pred_fallthru
          _
      $region16: #{tpu_custom_call.1} parent=5 // pred_fallthru
        _
      %p245 = scmp.le.s32.totalorder 1, %s23
      %p246 = scmp.lt.s32.totalorder %s23, 3
      %p247 = pnand %p245, %p246
      %p248 = pneg %p247
      // Predicated region
      $region29: #{tpu_custom_call.1} parent=5 // pred_check
        _
      $region30: #{tpu_custom_call.1} parent=5 // pred_check_branch
        %250 = sbr.rel (%p247) target = $region32
      $region31: #{tpu_custom_call.1} parent=5 // pred_region
        %s251 = ssub.s32 %s23, 1
        %s252 = sand.u32 %s50, 1
        %s253 = scalar_lea.sflag [#allocation3], %s252
        %s254 = sand.u32 %s50, 1
        %s255 = smul.addr %s254, 8
        %s256 = scalar_lea.vmem [#allocation2], %s255
        // Predicated region
        $region33: #{tpu_custom_call.1} parent=31 // pred_check
          %p257 = pneg %p63
        $region34: #{tpu_custom_call.1} parent=31 // pred_check_branch
          %259 = sbr.rel (%p257) target = $region36
        $region35: #{tpu_custom_call.1} parent=31 // pred_region
          %260 = dma.done %s253, 128
        $region36: #{tpu_custom_call.1} parent=31 // pred_fallthru
          _
        %s261 = sand.u32 %s28, 1
        %s262 = scalar_lea.sflag [#allocation6], %s261
        %s263 = sand.u32 %s76, 1
        %s264 = smul.addr %s263, 8
        %s265 = scalar_lea.vmem [#allocation5], %s264
        // Predicated region
        $region37: #{tpu_custom_call.1} parent=31 // pred_check
          %p266 = pneg %p89
        $region38: #{tpu_custom_call.1} parent=31 // pred_check_branch
          %268 = sbr.rel (%p266) target = $region40
        $region39: #{tpu_custom_call.1} parent=31 // pred_region
          %269 = dma.done %s262, 128
        $region40: #{tpu_custom_call.1} parent=31 // pred_fallthru
          _
        %s270 = sand.u32 %s28, 1
        %s271 = scalar_lea.sflag [#allocation6], %s270
        %s272 = sand.u32 %s102, 1
        %s273 = smul.addr %s272, 8
        %s274 = scalar_lea.vmem [#allocation7], %s273
        // Predicated region
        $region41: #{tpu_custom_call.1} parent=31 // pred_check
          %p275 = pneg %p115
        $region42: #{tpu_custom_call.1} parent=31 // pred_check_branch
          %277 = sbr.rel (%p275) target = $region44
        $region43: #{tpu_custom_call.1} parent=31 // pred_region
          %278 = dma.done %s271, 128
        $region44: #{tpu_custom_call.1} parent=31 // pred_fallthru
          _
        %s279 = sand.u32 %s50, 1
        %s280 = scalar_lea.sflag [#allocation3], %s279
        %s281 = sand.u32 %s50, 1
        %s282 = smul.addr %s281, 8
        %s283 = scalar_lea.vmem [#allocation2], %s282
        %p284 = pneg %p63
        %p285 = pneg %p60
        %s286 = sand.u32 %s28, 1
        %s287 = scalar_lea.sflag [#allocation6], %s286
        %s288 = sand.u32 %s76, 1
        %s289 = smul.addr %s288, 8
        %s290 = scalar_lea.vmem [#allocation5], %s289
        %p291 = pneg %p89
        %p292 = pneg %p86
        %s293 = sand.u32 %s28, 1
        %s294 = scalar_lea.sflag [#allocation6], %s293
        %s295 = sand.u32 %s102, 1
        %s296 = smul.addr %s295, 8
        %s297 = scalar_lea.vmem [#allocation7], %s296
        %p298 = pneg %p115
        %p299 = pneg %p112
        %p300 = pneg %p143
        %p301 = pneg %p140
        %s302 = sand.u32 %s130, 1
        %s303 = scalar_lea.sflag [#allocation4], %s302
        %s304 = sand.u32 %s130, 1
        %s305 = smul.addr %s304, 8
        %s306 = scalar_lea.vmem [#allocation8], %s305
        %p307 = pneg %p171
        %p308 = pneg %p168
        %s309 = sand.u32 %s158, 1
        %s310 = scalar_lea.sflag [#allocation10], %s309
        %s311 = sand.u32 %s158, 1
        %s312 = smul.addr %s311, 8
        %s313 = scalar_lea.vmem [#allocation9], %s312
        %v314 = vld [vmem:[%s256] sm:$0xff]
        %v315 = vld [vmem:[%s265] sm:$0xff]
        %v316 = vld [vmem:[%s274] sm:$0xff]
        %v317 = vmul.f32 %v314, 0.17677669
        %vm318 = vcmask 261120
        %v320 = vsel %vm318, %v317, 0
        %v323 = vsel %vm318, %v315, 0
        %325 = vmatprep.subr.mxu0 0.0
        %326 = vmatpush1.xpose.msra.mxu0 %v323
        %327 = vmatprep.subr.mxu0 0.0
        %328 = vmatpush1.xpose.msra.mxu0 0.0
        %329 = vmatprep.subr.mxu0 0.0
        %330 = vmatpush1.xpose.msra.mxu0 0.0
        %331 = vmatprep.subr.mxu0 0.0
        %332 = vmatpush1.xpose.msra.mxu0 0.0
        %333 = vmatprep.subr.mxu0 0.0
        %334 = vmatpush1.xpose.msra.mxu0 0.0
        %335 = vmatprep.subr.mxu0 0.0
        %336 = vmatpush1.xpose.msra.mxu0 0.0
        %337 = vmatprep.subr.mxu0 0.0
        %338 = vmatpush1.xpose.msra.mxu0 0.0
        %339 = vmatprep.subr.mxu0 0.0
        %340 = vmatpush1.xpose.msra.mxu0 0.0
        %341 = vmatprep.subr.mxu0 0.0
        %342 = vmatpush1.xpose.msra.mxu0 0.0
        %343 = vmatprep.subr.mxu0 0.0
        %344 = vmatpush1.xpose.msra.mxu0 0.0
        %345 = vmatprep.subr.mxu0 0.0
        %346 = vmatpush1.xpose.msra.mxu0 0.0
        %347 = vmatprep.subr.mxu0 0.0
        %348 = vmatpush1.xpose.msra.mxu0 0.0
        %349 = vmatprep.subr.mxu0 0.0
        %350 = vmatpush1.xpose.msra.mxu0 0.0
        %351 = vmatprep.subr.mxu0 0.0
        %352 = vmatpush1.xpose.msra.mxu0 0.0
        %353 = vmatprep.subr.mxu0 0.0
        %354 = vmatpush1.xpose.msra.mxu0 0.0
        %355 = vmatprep.subr.mxu0 0.0
        %356 = vmatpush1.xpose.msra.mxu0 0.0
        %357 = vmatprep.subr.mxu0 0.0
        %358 = vmatpush1.xpose.msra.mxu0 0.0
        %359 = vmatprep.subr.mxu0 0.0
        %360 = vmatpush1.xpose.msra.mxu0 0.0
        %361 = vmatprep.subr.mxu0 0.0
        %362 = vmatpush1.xpose.msra.mxu0 0.0
        %363 = vmatprep.subr.mxu0 0.0
        %364 = vmatpush1.xpose.msra.mxu0 0.0
        %365 = vmatprep.subr.mxu0 0.0
        %366 = vmatpush1.xpose.msra.mxu0 0.0
        %367 = vmatprep.subr.mxu0 0.0
        %368 = vmatpush1.xpose.msra.mxu0 0.0
        %369 = vmatprep.subr.mxu0 0.0
        %370 = vmatpush1.xpose.msra.mxu0 0.0
        %371 = vmatprep.subr.mxu0 0.0
        %372 = vmatpush1.xpose.msra.mxu0 0.0
        %373 = vmatprep.subr.mxu0 0.0
        %374 = vmatpush1.xpose.msra.mxu0 0.0
        %375 = vmatprep.subr.mxu0 0.0
        %376 = vmatpush1.xpose.msra.mxu0 0.0
        %377 = vmatprep.subr.mxu0 0.0
        %378 = vmatpush1.xpose.msra.mxu0 0.0
        %379 = vmatprep.subr.mxu0 0.0
        %380 = vmatpush1.xpose.msra.mxu0 0.0
        %381 = vmatprep.subr.mxu0 0.0
        %382 = vmatpush1.xpose.msra.mxu0 0.0
        %383 = vmatprep.subr.mxu0 0.0
        %384 = vmatpush1.xpose.msra.mxu0 0.0
        %385 = vmatprep.subr.mxu0 0.0
        %386 = vmatpush1.xpose.msra.mxu0 0.0
        %387 = vmatprep.subr.mxu0 0.0
        %388 = vmatpush1.xpose.msra.mxu0 0.0
        %389 = vmatprep.mubr.f32.mxu0 0.0
        %390 = vmatmul.mubr.f32.gmra.mrb[0].mxu0 %v320
        %v391 = vpop.f32.mrb[0].mxu0
        %v392 = vadd.f32 0.0, %v391
        %v393 = vpop.f32.mrb[0].mxu0
        %394 = vdwg.mxu0
        %vm395 = vcmask 64512
        %v396 = vsel %vm395, %v392, -inf
        %397 = vmax.xlane.f32.xlu0 %v396
        %v398 = vpop.xlane.xlu0 %397
        %v399 = vsub.f32 %v392, %v398
        %v400 = vmul.f32 %v399, 1.442695
        %v401 = vpow.pop %v400
        %v402 = vsel %vm395, %v401, 0.0
        %403 = vadd.xlane.f32.xlu0 %v402
        %v404 = vpop.xlane.xlu0 %403
        %v405 = vrcp.pop %v404
        %v406 = vmul.f32 %v404, %v405
        %v407 = vsub.f32 2.0, %v406
        %v408 = vmul.f32 %v405, %v407
        %v409 = vmul.f32 %v404, %v408
        %v410 = vsub.f32 2.0, %v409
        %v411 = vmul.f32 %v408, %v410
        %v412 = vmul.f32 %v401, %v411
        %v414 = vsel %vm395, %v412, 0
        %416 = vmatprep.subr.mxu0 0.0
        %417 = vmatpush1.msra.mxu0 %v316
        %418 = vmatprep.subr.mxu0 0.0
        %419 = vmatpush1.msra.mxu0 0.0
        %420 = vmatprep.subr.mxu0 0.0
        %421 = vmatpush1.msra.mxu0 0.0
        %422 = vmatprep.subr.mxu0 0.0
        %423 = vmatpush1.msra.mxu0 0.0
        %424 = vmatprep.subr.mxu0 0.0
        %425 = vmatpush1.msra.mxu0 0.0
        %426 = vmatprep.subr.mxu0 0.0
        %427 = vmatpush1.msra.mxu0 0.0
        %428 = vmatprep.subr.mxu0 0.0
        %429 = vmatpush1.msra.mxu0 0.0
        %430 = vmatprep.subr.mxu0 0.0
        %431 = vmatpush1.msra.mxu0 0.0
        %432 = vmatprep.subr.mxu0 0.0
        %433 = vmatpush1.msra.mxu0 0.0
        %434 = vmatprep.subr.mxu0 0.0
        %435 = vmatpush1.msra.mxu0 0.0
        %436 = vmatprep.subr.mxu0 0.0
        %437 = vmatpush1.msra.mxu0 0.0
        %438 = vmatprep.subr.mxu0 0.0
        %439 = vmatpush1.msra.mxu0 0.0
        %440 = vmatprep.subr.mxu0 0.0
        %441 = vmatpush1.msra.mxu0 0.0
        %442 = vmatprep.subr.mxu0 0.0
        %443 = vmatpush1.msra.mxu0 0.0
        %444 = vmatprep.subr.mxu0 0.0
        %445 = vmatpush1.msra.mxu0 0.0
        %446 = vmatprep.subr.mxu0 0.0
        %447 = vmatpush1.msra.mxu0 0.0
        %448 = vmatprep.subr.mxu0 0.0
        %449 = vmatpush1.msra.mxu0 0.0
        %450 = vmatprep.subr.mxu0 0.0
        %451 = vmatpush1.msra.mxu0 0.0
        %452 = vmatprep.subr.mxu0 0.0
        %453 = vmatpush1.msra.mxu0 0.0
        %454 = vmatprep.subr.mxu0 0.0
        %455 = vmatpush1.msra.mxu0 0.0
        %456 = vmatprep.subr.mxu0 0.0
        %457 = vmatpush1.msra.mxu0 0.0
        %458 = vmatprep.subr.mxu0 0.0
        %459 = vmatpush1.msra.mxu0 0.0
        %460 = vmatprep.subr.mxu0 0.0
        %461 = vmatpush1.msra.mxu0 0.0
        %462 = vmatprep.subr.mxu0 0.0
        %463 = vmatpush1.msra.mxu0 0.0
        %464 = vmatprep.subr.mxu0 0.0
        %465 = vmatpush1.msra.mxu0 0.0
        %466 = vmatprep.subr.mxu0 0.0
        %467 = vmatpush1.msra.mxu0 0.0
        %468 = vmatprep.subr.mxu0 0.0
        %469 = vmatpush1.msra.mxu0 0.0
        %470 = vmatprep.subr.mxu0 0.0
        %471 = vmatpush1.msra.mxu0 0.0
        %472 = vmatprep.subr.mxu0 0.0
        %473 = vmatpush1.msra.mxu0 0.0
        %474 = vmatprep.subr.mxu0 0.0
        %475 = vmatpush1.msra.mxu0 0.0
        %476 = vmatprep.subr.mxu0 0.0
        %477 = vmatpush1.msra.mxu0 0.0
        %478 = vmatprep.subr.mxu0 0.0
        %479 = vmatpush1.msra.mxu0 0.0
        %480 = vmatprep.mubr.f32.mxu0 0.0
        %481 = vmatmul.mubr.f32.gmra.mrb[0].mxu0 %v414
        %v482 = vpop.f32.mrb[0].mxu0
        %v483 = vadd.f32 0.0, %v482
        %v484 = vpop.f32.mrb[0].mxu0
        %485 = vdwg.mxu0
        %486 = vst.msk [vmem:[%s313] sm:$0xff] %vm395, %v412
        %487 = vst.msk [vmem:[%s306] sm:$0xff] %vm318, %v483
        %s488 = sand.u32 %s130, 1
        %s489 = scalar_lea.sflag [#allocation4], %s488
        %s490 = sand.u32 %s130, 1
        %s491 = smul.addr %s490, 8
        %s492 = scalar_lea.vmem [#allocation8], %s491
        %s493 = sand.u32 %s158, 1
        %s494 = scalar_lea.sflag [#allocation10], %s493
        %s495 = sand.u32 %s158, 1
        %s496 = smul.addr %s495, 8
        %s497 = scalar_lea.vmem [#allocation9], %s496
        // Predicated region
        $region45: #{tpu_custom_call.1} parent=31 // pred_check
          %p498 = pneg %p140
        $region46: #{tpu_custom_call.1} parent=31 // pred_check_branch
          %500 = sbr.rel (%p498) target = $region48
        $region47: #{tpu_custom_call.1} parent=31 // pred_region
          %s502 = ssub.s32 128, 128
          %503 = vsyncadd %s489, %s502
          %s504 = sadd.s32 %s33, %s32
          %s505 = smul.addr %s504, 128
          %s506 = scalar_lea.hbm %s3, %s505
          %s508 = sshll.u32 %s492, 4
          %s509 = int_to_ptr.vmem [resolvable:$true] %s508
          %511 = dma.vmem_to_hbm [thread:$0]  %s509, 128, %s506, %s489
        $region48: #{tpu_custom_call.1} parent=31 // pred_fallthru
          _
        // Predicated region
        $region49: #{tpu_custom_call.1} parent=31 // pred_check
          %p512 = pneg %p168
        $region50: #{tpu_custom_call.1} parent=31 // pred_check_branch
          %514 = sbr.rel (%p512) target = $region52
        $region51: #{tpu_custom_call.1} parent=31 // pred_region
          %s516 = ssub.s32 128, 128
          %517 = vsyncadd %s494, %s516
          %s518 = sadd.s32 %s33, %s32
          %s519 = smul.addr %s518, 128
          %s520 = scalar_lea.hbm %s4, %s519
          %s522 = sshll.u32 %s497, 4
          %s523 = int_to_ptr.vmem [resolvable:$true] %s522
          %525 = dma.vmem_to_hbm [thread:$0]  %s523, 128, %s520, %s494
        $region52: #{tpu_custom_call.1} parent=31 // pred_fallthru
          _
      $region32: #{tpu_custom_call.1} parent=5 // pred_fallthru
        _
      %p526 = scmp.le.s32.totalorder 2, %s23
      // Predicated region
      $region53: #{tpu_custom_call.1} parent=5 // pred_check
        %p527 = pneg %p526
      $region54: #{tpu_custom_call.1} parent=5 // pred_check_branch
        %529 = sbr.rel (%p527) target = $region56
      $region55: #{tpu_custom_call.1} parent=5 // pred_region
        %s530 = ssub.s32 %s23, 2
        // Predicated region
        $region57: #{tpu_custom_call.1} parent=55 // pred_check
          %p531 = pneg %p146
        $region58: #{tpu_custom_call.1} parent=55 // pred_check_branch
          %533 = sbr.rel (%p531) target = $region60
        $region59: #{tpu_custom_call.1} parent=55 // pred_region
          %s534 = sand.u32 %s131, 1
          %s535 = scalar_lea.sflag [#allocation4], %s534
          %s536 = sand.u32 %s131, 1
          %s537 = smul.addr %s536, 8
          %s538 = scalar_lea.vmem [#allocation8], %s537
          %539 = dma.done %s535, 128
        $region60: #{tpu_custom_call.1} parent=55 // pred_fallthru
          _
        // Predicated region
        $region61: #{tpu_custom_call.1} parent=55 // pred_check
          %p540 = pneg %p174
        $region62: #{tpu_custom_call.1} parent=55 // pred_check_branch
          %542 = sbr.rel (%p540) target = $region64
        $region63: #{tpu_custom_call.1} parent=55 // pred_region
          %s543 = sand.u32 %s159, 1
          %s544 = scalar_lea.sflag [#allocation10], %s543
          %s545 = sand.u32 %s159, 1
          %s546 = smul.addr %s545, 8
          %s547 = scalar_lea.vmem [#allocation9], %s546
          %548 = dma.done %s544, 128
        $region64: #{tpu_custom_call.1} parent=55 // pred_fallthru
          _
      $region56: #{tpu_custom_call.1} parent=5 // pred_fallthru
        _
    $region6: #{tpu_custom_call.1} parent=1 // loop_footer
      %s27 = sadd.s32 1, %s23
    $region7: #{tpu_custom_call.1} parent=1 // loop_footer_branch
      %22 = sbr.rel target = $region3
    $region8: #{tpu_custom_call.1} parent=1 // loop_exit
      _
    %549 = vsyncpa [#allocation3], 1
    %s550 = scalar_lea.sflag [#allocation3], 1
    %551 = vsyncpa %s550, 1
    %552 = vsyncpa [#allocation6], 1
    %s553 = scalar_lea.sflag [#allocation6], 1
    %554 = vsyncpa %s553, 1
    %555 = vsyncpa [#allocation4], 1
    %s556 = scalar_lea.sflag [#allocation4], 1
    %557 = vsyncpa %s556, 1
    %558 = vsyncpa [#allocation10], 1
    %s559 = scalar_lea.sflag [#allocation10], 1
    %560 = vsyncpa %s559, 1

</llo_original>
